<compile_context>
chip_gen: v6e
topology: v6e:2x2x1
jax: 0.10.0
libtpu: 0.0.40
codegen_flags: <defaults>
</compile_context>

<pallas_src>
import functools

import jax
import jax.numpy as jnp
from jax import lax
from jax.experimental import pallas as pl
from jax.experimental.pallas import tpu as pltpu


def _round_up(x, m):
    return ((x + m - 1) // m) * m


def reinforce_policy_kernel(
    x_ref,
    w1_ref, b1_ref,
    w2_ref, b2_ref,
    w3_ref, b3_ref,
    w4_ref, b4_ref,
    wh_ref, bh_ref,
    out_ref,
    *, action_size,
):
    """4 x (Linear+ReLU) trunk, then one fused (mean | log_std) head matmul.

    Weights are bf16 (MXU-friendly); bias add / ReLU / exp stay in f32.
    Output slab layout: out[:, :A] = mean, out[:, A:] = exp(log_std).
    """

    def dense(h, w_ref, b_ref):
        # bf16 x bf16 -> f32 accumulate on the MXU, bias add in f32 on the VPU.
        return jnp.dot(h.astype(jnp.bfloat16), w_ref[...],
                       preferred_element_type=jnp.float32) + b_ref[...]

    h = x_ref[...]
    h = jnp.maximum(dense(h, w1_ref, b1_ref), 0.0)
    h = jnp.maximum(dense(h, w2_ref, b2_ref), 0.0)
    h = jnp.maximum(dense(h, w3_ref, b3_ref), 0.0)
    h = jnp.maximum(dense(h, w4_ref, b4_ref), 0.0)

    head = dense(h, wh_ref, bh_ref)              # (TM, 2*A): [mean | log_std]
    col = lax.broadcasted_iota(jnp.int32, head.shape, 1)
    # exp on the EUP is essentially free; mask-select keeps one lane-dense store.
    out_ref[...] = jnp.where(col < action_size, head, jnp.exp(head))


def reinforce_policy_forward(x, packed, *, tm=None):
    """x: (B, state_size) f32.  packed: dict from pack_params (bf16 weights,
    f32 biases, fused head).  Returns (mean, std), both (B, action_size) f32."""
    B, S = x.shape
    A2 = packed["wh"].shape[1]
    A = A2 // 2

    # Batch tile: multiple of 8 sublanes, large enough that per-grid-step
    # overhead (~0.35 us) stays negligible, capped at 512 rows.
    if tm is None:
        tm = min(_round_up(max(B, 8), 8), 512)
    tm = _round_up(tm, 8)
    Bp = _round_up(B, tm)
    if Bp != B:
        x = jnp.pad(x, ((0, Bp - B), (0, 0)))

    grid = (Bp // tm,)

    weight_args = (
        packed["w1"], packed["b1"],
        packed["w2"], packed["b2"],
        packed["w3"], packed["b3"],
        packed["w4"], packed["b4"],
        packed["wh"], packed["bh"],
    )

    def resident_spec(a):
        # Full-array block + constant index_map: weights stay VMEM-resident
        # across all grid iterations (total footprint ~0.2 MB in bf16).
        return pl.BlockSpec(a.shape, lambda i: (0, 0))

    in_specs = [pl.BlockSpec((tm, S), lambda i: (i, 0))]
    in_specs += [resident_spec(a) for a in weight_args]
    out_spec = pl.BlockSpec((tm, A2), lambda i: (i, 0))

    out = pl.pallas_call(
        functools.partial(reinforce_policy_kernel, action_size=A),
        out_shape=jax.ShapeDtypeStruct((Bp, A2), jnp.float32),
        grid=grid,
        in_specs=in_specs,
        out_specs=out_spec,
        compiler_params=pltpu.CompilerParams(
            dimension_semantics=("parallel",)),
    )(x, *weight_args)

    out = out[:B]
    return out[:, :A], out[:, A:]


def init_params(key, state_size, action_size):
    """Deterministic f32 init mimicking nn.Linear's U(-1/sqrt(fan_in), ...).

    Weights are stored transposed: (in_features, out_features)."""
    layer_dims = [
        ("w1", "b1", state_size, 64),
        ("w2", "b2", 64, 256),
        ("w3", "b3", 256, 256),
        ("w4", "b4", 256, 64),
        ("wm", "bm", 64, action_size),
        ("ws", "bs", 64, action_size),
    ]
    params = {}
    for wname, bname, fan_in, fan_out in layer_dims:
        key, kw, kb = jax.random.split(key, 3)
        bound = 1.0 / jnp.sqrt(jnp.float32(fan_in))
        params[wname] = jax.random.uniform(
            kw, (fan_in, fan_out), jnp.float32, minval=-bound, maxval=bound
        )
        params[bname] = jax.random.uniform(
            kb, (1, fan_out), jnp.float32, minval=-bound, maxval=bound
        )
    return params


def pack_params(params):
    """Fuse the two heads into one (64, 2*A) matrix and cast weights to bf16."""
    packed = {}
    for name in ("w1", "w2", "w3", "w4"):
        packed[name] = params[name].astype(jnp.bfloat16)
    for name in ("b1", "b2", "b3", "b4"):
        packed[name] = params[name].astype(jnp.float32)
    packed["wh"] = jnp.concatenate(
        [params["wm"], params["ws"]], axis=1).astype(jnp.bfloat16)
    packed["bh"] = jnp.concatenate(
        [params["bm"], params["bs"]], axis=1).astype(jnp.float32)
    return packed


def reference_forward(x, params):
    """Pure-JAX f32 reference (matches the PyTorch module's forward)."""
    h = jnp.maximum(x @ params["w1"] + params["b1"], 0.0)
    h = jnp.maximum(h @ params["w2"] + params["b2"], 0.0)
    h = jnp.maximum(h @ params["w3"] + params["b3"], 0.0)
    h = jnp.maximum(h @ params["w4"] + params["b4"], 0.0)
    mean = h @ params["wm"] + params["bm"]
    std = jnp.exp(h @ params["ws"] + params["bs"])
    return mean, std


if __name__ == "__main__":
    key = jax.random.PRNGKey(0)
    key, kx, kp = jax.random.split(key, 3)

    batch = 8
    state_size = 8     # small synthetic state dimension
    action_size = 4    # small synthetic action dimension

    params = init_params(kp, state_size, action_size)
    packed = pack_params(params)

    x = jax.random.normal(kx, (batch, state_size), jnp.float32)
    mean, std = reinforce_policy_forward(x, packed)
    jax.block_until_ready((mean, std))

    ref_mean, ref_std = reference_forward(x, params)
    assert mean.shape == (batch, action_size)
    assert std.shape == (batch, action_size)
    # bf16 matmul inputs (f32 accumulate) -> relaxed tolerance vs f32 reference.
    assert jnp.allclose(mean, ref_mean, atol=5e-2, rtol=5e-2)
    assert jnp.allclose(std, ref_std, atol=5e-2, rtol=5e-2)
    assert bool(jnp.all(std > 0.0))

    # Second check: exercises a multi-step batch grid and ragged-batch padding.
    key, kx2 = jax.random.split(key)
    x2 = jax.random.normal(kx2, (200, state_size), jnp.float32)
    mean2, std2 = reinforce_policy_forward(x2, packed, tm=64)
    jax.block_until_ready((mean2, std2))
    ref_mean2, ref_std2 = reference_forward(x2, params)
    assert mean2.shape == (200, action_size)
    assert std2.shape == (200, action_size)
    assert jnp.allclose(mean2, ref_mean2, atol=5e-2, rtol=5e-2)
    assert jnp.allclose(std2, ref_std2, atol=5e-2, rtol=5e-2)
    assert bool(jnp.all(std2 > 0.0))

    # TODO(synk): optionally fuse Normal sampling / log_prob (policy.act) into
    # the kernel tail with pltpu.prng_* to hide further launch overhead.
    print("KERNEL_OK")
</pallas_src>

<mosaic_0001>
module attributes {stable_mosaic.version = 11 : i64} {
  func.func @reinforce_policy_kernel(%arg0: i32, %arg1: memref<8x8xf32, #tpu.memory_space<vmem>>, %arg2: memref<8x64xbf16, #tpu.memory_space<vmem>>, %arg3: memref<1x64xf32, #tpu.memory_space<vmem>>, %arg4: memref<64x256xbf16, #tpu.memory_space<vmem>>, %arg5: memref<1x256xf32, #tpu.memory_space<vmem>>, %arg6: memref<256x256xbf16, #tpu.memory_space<vmem>>, %arg7: memref<1x256xf32, #tpu.memory_space<vmem>>, %arg8: memref<256x64xbf16, #tpu.memory_space<vmem>>, %arg9: memref<1x64xf32, #tpu.memory_space<vmem>>, %arg10: memref<64x8xbf16, #tpu.memory_space<vmem>>, %arg11: memref<1x8xf32, #tpu.memory_space<vmem>>, %arg12: memref<8x8xf32, #tpu.memory_space<vmem>>) attributes {dimension_semantics = [#tpu.dimension_semantics<parallel>], iteration_bounds = array<i64: 1>, scalar_prefetch = 0 : i64, scratch_operands = 0 : i64, tpu.core_type = #tpu.core_type<tc>, window_params = [{transform_indices = @transform_0, window_bounds = array<i64: 8, 8>}, {pipeline_mode = #tpu.pipeline_mode<synchronous>, transform_indices = @transform_1, window_bounds = array<i64: 8, 64>}, {pipeline_mode = #tpu.pipeline_mode<synchronous>, transform_indices = @transform_2, window_bounds = array<i64: 1, 64>}, {pipeline_mode = #tpu.pipeline_mode<synchronous>, transform_indices = @transform_3, window_bounds = array<i64: 64, 256>}, {pipeline_mode = #tpu.pipeline_mode<synchronous>, transform_indices = @transform_4, window_bounds = array<i64: 1, 256>}, {pipeline_mode = #tpu.pipeline_mode<synchronous>, transform_indices = @transform_5, window_bounds = array<i64: 256, 256>}, {pipeline_mode = #tpu.pipeline_mode<synchronous>, transform_indices = @transform_6, window_bounds = array<i64: 1, 256>}, {pipeline_mode = #tpu.pipeline_mode<synchronous>, transform_indices = @transform_7, window_bounds = array<i64: 256, 64>}, {pipeline_mode = #tpu.pipeline_mode<synchronous>, transform_indices = @transform_8, window_bounds = array<i64: 1, 64>}, {pipeline_mode = #tpu.pipeline_mode<synchronous>, transform_indices = @transform_9, window_bounds = array<i64: 64, 8>}, {pipeline_mode = #tpu.pipeline_mode<synchronous>, transform_indices = @transform_10, window_bounds = array<i64: 1, 8>}, {transform_indices = @transform_11, window_bounds = array<i64: 8, 8>}]} {
    %c0 = arith.constant 0 : index
    %c0_0 = arith.constant 0 : index
    %0 = vector.load %arg1[%c0, %c0_0] : memref<8x8xf32, #tpu.memory_space<vmem>>, vector<8x8xf32>
    %1 = arith.truncf %0 : vector<8x8xf32> to vector<8x8xbf16>
    %c0_1 = arith.constant 0 : index
    %c0_2 = arith.constant 0 : index
    %2 = vector.load %arg2[%c0_1, %c0_2] : memref<8x64xbf16, #tpu.memory_space<vmem>>, vector<8x64xbf16>
    %cst = arith.constant dense<0.000000e+00> : vector<8x64xf32>
    %3 = tpu.matmul %1, %2, %cst {dimension_numbers = #tpu.dot_dimension_numbers<[1], [0], [0], [1], [0, 0, 1, 1], [], []>} : vector<8x8xbf16>, vector<8x64xbf16>, vector<8x64xf32> -> vector<8x64xf32>
    %c0_3 = arith.constant 0 : index
    %c0_4 = arith.constant 0 : index
    %4 = vector.load %arg3[%c0_3, %c0_4] : memref<1x64xf32, #tpu.memory_space<vmem>>, vector<1x64xf32>
    %5 = vector.broadcast %4 : vector<1x64xf32> to vector<8x64xf32>
    %6 = arith.addf %3, %5 : vector<8x64xf32>
    %cst_5 = arith.constant 0.000000e+00 : f32
    %7 = vector.broadcast %cst_5 : f32 to vector<8x64xf32>
    %8 = arith.maximumf %6, %7 : vector<8x64xf32>
    %9 = arith.truncf %8 : vector<8x64xf32> to vector<8x64xbf16>
    %c0_6 = arith.constant 0 : index
    %c0_7 = arith.constant 0 : index
    %10 = vector.load %arg4[%c0_6, %c0_7] : memref<64x256xbf16, #tpu.memory_space<vmem>>, vector<64x256xbf16>
    %cst_8 = arith.constant dense<0.000000e+00> : vector<8x256xf32>
    %11 = tpu.matmul %9, %10, %cst_8 {dimension_numbers = #tpu.dot_dimension_numbers<[1], [0], [0], [1], [0, 0, 1, 1], [], []>} : vector<8x64xbf16>, vector<64x256xbf16>, vector<8x256xf32> -> vector<8x256xf32>
    %c0_9 = arith.constant 0 : index
    %c0_10 = arith.constant 0 : index
    %12 = vector.load %arg5[%c0_9, %c0_10] : memref<1x256xf32, #tpu.memory_space<vmem>>, vector<1x256xf32>
    %13 = vector.broadcast %12 : vector<1x256xf32> to vector<8x256xf32>
    %14 = arith.addf %11, %13 : vector<8x256xf32>
    %cst_11 = arith.constant 0.000000e+00 : f32
    %15 = vector.broadcast %cst_11 : f32 to vector<8x256xf32>
    %16 = arith.maximumf %14, %15 : vector<8x256xf32>
    %17 = arith.truncf %16 : vector<8x256xf32> to vector<8x256xbf16>
    %c0_12 = arith.constant 0 : index
    %c0_13 = arith.constant 0 : index
    %18 = vector.load %arg6[%c0_12, %c0_13] : memref<256x256xbf16, #tpu.memory_space<vmem>>, vector<256x256xbf16>
    %cst_14 = arith.constant dense<0.000000e+00> : vector<8x256xf32>
    %19 = tpu.matmul %17, %18, %cst_14 {dimension_numbers = #tpu.dot_dimension_numbers<[1], [0], [0], [1], [0, 0, 1, 1], [], []>} : vector<8x256xbf16>, vector<256x256xbf16>, vector<8x256xf32> -> vector<8x256xf32>
    %c0_15 = arith.constant 0 : index
    %c0_16 = arith.constant 0 : index
    %20 = vector.load %arg7[%c0_15, %c0_16] : memref<1x256xf32, #tpu.memory_space<vmem>>, vector<1x256xf32>
    %21 = vector.broadcast %20 : vector<1x256xf32> to vector<8x256xf32>
    %22 = arith.addf %19, %21 : vector<8x256xf32>
    %cst_17 = arith.constant 0.000000e+00 : f32
    %23 = vector.broadcast %cst_17 : f32 to vector<8x256xf32>
    %24 = arith.maximumf %22, %23 : vector<8x256xf32>
    %25 = arith.truncf %24 : vector<8x256xf32> to vector<8x256xbf16>
    %c0_18 = arith.constant 0 : index
    %c0_19 = arith.constant 0 : index
    %26 = vector.load %arg8[%c0_18, %c0_19] : memref<256x64xbf16, #tpu.memory_space<vmem>>, vector<256x64xbf16>
    %cst_20 = arith.constant dense<0.000000e+00> : vector<8x64xf32>
    %27 = tpu.matmul %25, %26, %cst_20 {dimension_numbers = #tpu.dot_dimension_numbers<[1], [0], [0], [1], [0, 0, 1, 1], [], []>} : vector<8x256xbf16>, vector<256x64xbf16>, vector<8x64xf32> -> vector<8x64xf32>
    %c0_21 = arith.constant 0 : index
    %c0_22 = arith.constant 0 : index
    %28 = vector.load %arg9[%c0_21, %c0_22] : memref<1x64xf32, #tpu.memory_space<vmem>>, vector<1x64xf32>
    %29 = vector.broadcast %28 : vector<1x64xf32> to vector<8x64xf32>
    %30 = arith.addf %27, %29 : vector<8x64xf32>
    %cst_23 = arith.constant 0.000000e+00 : f32
    %31 = vector.broadcast %cst_23 : f32 to vector<8x64xf32>
    %32 = arith.maximumf %30, %31 : vector<8x64xf32>
    %33 = arith.truncf %32 : vector<8x64xf32> to vector<8x64xbf16>
    %c0_24 = arith.constant 0 : index
    %c0_25 = arith.constant 0 : index
    %34 = vector.load %arg10[%c0_24, %c0_25] : memref<64x8xbf16, #tpu.memory_space<vmem>>, vector<64x8xbf16>
    %cst_26 = arith.constant dense<0.000000e+00> : vector<8x8xf32>
    %35 = tpu.matmul %33, %34, %cst_26 {dimension_numbers = #tpu.dot_dimension_numbers<[1], [0], [0], [1], [0, 0, 1, 1], [], []>} : vector<8x64xbf16>, vector<64x8xbf16>, vector<8x8xf32> -> vector<8x8xf32>
    %c0_27 = arith.constant 0 : index
    %c0_28 = arith.constant 0 : index
    %36 = vector.load %arg11[%c0_27, %c0_28] : memref<1x8xf32, #tpu.memory_space<vmem>>, vector<1x8xf32>
    %37 = vector.broadcast %36 : vector<1x8xf32> to vector<8x8xf32>
    %38 = arith.addf %35, %37 : vector<8x8xf32>
    %39 = tpu.iota {dimensions = array<i32: 1>} : vector<8x8xi32>
    %c4_i32 = arith.constant 4 : i32
    %40 = vector.broadcast %c4_i32 : i32 to vector<8x8xi32>
    %41 = arith.cmpi slt, %39, %40 : vector<8x8xi32>
    %42 = math.exp %38 : vector<8x8xf32>
    %43 = arith.select %41, %38, %42 : vector<8x8xi1>, vector<8x8xf32>
    %c0_29 = arith.constant 0 : index
    %c0_30 = arith.constant 0 : index
    %44 = vector.load %arg12[%c0_29, %c0_30] : memref<8x8xf32, #tpu.memory_space<vmem>>, vector<8x8xf32>
    tpu.vector_store %arg12[%c0_29, %c0_30], %43 {strides = array<i32>} : memref<8x8xf32, #tpu.memory_space<vmem>>, vector<8x8xf32>,
    return
  }
  func.func @transform_0(%arg0: i32) -> (i32, i32) {
    %c0_i32 = arith.constant 0 : i32
    %c0_i32_0 = arith.constant 0 : i32
    return %arg0, %c0_i32 : i32, i32
  }
  func.func @transform_1(%arg0: i32) -> (i32, i32) {
    %c0_i32 = arith.constant 0 : i32
    %c0_i32_0 = arith.constant 0 : i32
    %c0_i32_1 = arith.constant 0 : i32
    return %c0_i32, %c0_i32_0 : i32, i32
  }
  func.func @transform_2(%arg0: i32) -> (i32, i32) {
    %c0_i32 = arith.constant 0 : i32
    %c0_i32_0 = arith.constant 0 : i32
    %c0_i32_1 = arith.constant 0 : i32
    return %c0_i32, %c0_i32_0 : i32, i32
  }
  func.func @transform_3(%arg0: i32) -> (i32, i32) {
    %c0_i32 = arith.constant 0 : i32
    %c0_i32_0 = arith.constant 0 : i32
    %c0_i32_1 = arith.constant 0 : i32
    return %c0_i32, %c0_i32_0 : i32, i32
  }
  func.func @transform_4(%arg0: i32) -> (i32, i32) {
    %c0_i32 = arith.constant 0 : i32
    %c0_i32_0 = arith.constant 0 : i32
    %c0_i32_1 = arith.constant 0 : i32
    return %c0_i32, %c0_i32_0 : i32, i32
  }
  func.func @transform_5(%arg0: i32) -> (i32, i32) {
    %c0_i32 = arith.constant 0 : i32
    %c0_i32_0 = arith.constant 0 : i32
    %c0_i32_1 = arith.constant 0 : i32
    return %c0_i32, %c0_i32_0 : i32, i32
  }
  func.func @transform_6(%arg0: i32) -> (i32, i32) {
    %c0_i32 = arith.constant 0 : i32
    %c0_i32_0 = arith.constant 0 : i32
    %c0_i32_1 = arith.constant 0 : i32
    return %c0_i32, %c0_i32_0 : i32, i32
  }
  func.func @transform_7(%arg0: i32) -> (i32, i32) {
    %c0_i32 = arith.constant 0 : i32
    %c0_i32_0 = arith.constant 0 : i32
    %c0_i32_1 = arith.constant 0 : i32
    return %c0_i32, %c0_i32_0 : i32, i32
  }
  func.func @transform_8(%arg0: i32) -> (i32, i32) {
    %c0_i32 = arith.constant 0 : i32
    %c0_i32_0 = arith.constant 0 : i32
    %c0_i32_1 = arith.constant 0 : i32
    return %c0_i32, %c0_i32_0 : i32, i32
  }
  func.func @transform_9(%arg0: i32) -> (i32, i32) {
    %c0_i32 = arith.constant 0 : i32
    %c0_i32_0 = arith.constant 0 : i32
    %c0_i32_1 = arith.constant 0 : i32
    return %c0_i32, %c0_i32_0 : i32, i32
  }
  func.func @transform_10(%arg0: i32) -> (i32, i32) {
    %c0_i32 = arith.constant 0 : i32
    %c0_i32_0 = arith.constant 0 : i32
    %c0_i32_1 = arith.constant 0 : i32
    return %c0_i32, %c0_i32_0 : i32, i32
  }
  func.func @transform_11(%arg0: i32) -> (i32, i32) {
    %c0_i32 = arith.constant 0 : i32
    %c0_i32_0 = arith.constant 0 : i32
    return %arg0, %c0_i32 : i32, i32
  }
}

</mosaic_0001>

<llo_original>
// kernel: tpu_custom_call.1
$region0: #{tpu_custom_call.1}
  #allocation0 [shape = 'u32[]', space=smem, size = 0x4, offset = 0x4, fixed_abs, tag = 'smem constant byte address 0x4 - core index']
  #allocation1 [shape = 'u32[144,128]{1,0:T(1,128)}', space=vmem, size = 0x12000, scoped, tag = 'internal scratch']
  %s0 = inlined_call_operand.vmem [shape: f32[8,8], index: 0, kind: input, shape index: {}]
  %s1 = inlined_call_operand.vmem [shape: bf16[8,64], index: 1, kind: input, shape index: {}]
  %s2 = inlined_call_operand.vmem [shape: f32[1,64], index: 2, kind: input, shape index: {}]
  %s3 = inlined_call_operand.vmem [shape: bf16[64,256], index: 3, kind: input, shape index: {}]
  %s4 = inlined_call_operand.vmem [shape: f32[1,256], index: 4, kind: input, shape index: {}]
  %s5 = inlined_call_operand.hbm [shape: bf16[256,256], index: 5, kind: input, shape index: {}]
  %s6 = inlined_call_operand.vmem [shape: f32[1,256], index: 6, kind: input, shape index: {}]
  %s7 = inlined_call_operand.vmem [shape: bf16[256,64], index: 7, kind: input, shape index: {}]
  %s8 = inlined_call_operand.vmem [shape: f32[1,64], index: 8, kind: input, shape index: {}]
  %s9 = inlined_call_operand.vmem [shape: bf16[64,8], index: 9, kind: input, shape index: {}]
  %s10 = inlined_call_operand.vmem [shape: f32[1,8], index: 10, kind: input, shape index: {}]
  %s11 = inlined_call_operand.hbm [shape: f32[8,8], index: 11, kind: output, shape index: {}]
  %s12 = sld [smem:[#allocation0]]
  $region58: #{tpu_custom_call.1} parent=0
    _
  %s14 = ssub.s32 1, %s12
  %s15 = scalar_select 0, %s14, %s12
  $region1: #{tpu_custom_call.1} parent=0
    #allocation2 [shape = 'u8[131072]{0}', space=vmem, size = 0x20000, scoped, tag = 'input window, operand 5, single buffered']
    #allocation3 [shape = 's32[1]{0}', space=sflag, size = 0x4, scoped, tag = 'scoped memory for tpu_custom_call.1']
    #allocation4 [shape = 's32[1]{0}', space=sflag, size = 0x4, scoped, tag = 'scoped memory for tpu_custom_call.1']
    #allocation5 [shape = 'u8[4096]{0}', space=vmem, size = 0x1000, scoped, tag = 'output window, operand 0, single buffered']
    %16 = vsyncpa [#allocation3], 0
    %17 = vsyncpa [#allocation4], 0
    // Predicated region
    $region2: #{tpu_custom_call.1} parent=1 // pred_check
      _
    $region3: #{tpu_custom_call.1} parent=1 // pred_check_branch
      %19 = sbr.rel (0) target = $region5
    $region4: #{tpu_custom_call.1} parent=1 // pred_region
      _
    $region5: #{tpu_custom_call.1} parent=1 // pred_fallthru
      _
    // Predicated region
    $region6: #{tpu_custom_call.1} parent=1 // pred_check
      _
    $region7: #{tpu_custom_call.1} parent=1 // pred_check_branch
      %21 = sbr.rel (0) target = $region9
    $region8: #{tpu_custom_call.1} parent=1 // pred_region
      _
    $region9: #{tpu_custom_call.1} parent=1 // pred_fallthru
      _
    // Predicated region
    $region10: #{tpu_custom_call.1} parent=1 // pred_check
      _
    $region11: #{tpu_custom_call.1} parent=1 // pred_check_branch
      %23 = sbr.rel (0) target = $region13
    $region12: #{tpu_custom_call.1} parent=1 // pred_region
      _
    $region13: #{tpu_custom_call.1} parent=1 // pred_fallthru
      _
    // Predicated region
    $region14: #{tpu_custom_call.1} parent=1 // pred_check
      _
    $region15: #{tpu_custom_call.1} parent=1 // pred_check_branch
      %25 = sbr.rel (0) target = $region17
    $region16: #{tpu_custom_call.1} parent=1 // pred_region
      _
    $region17: #{tpu_custom_call.1} parent=1 // pred_fallthru
      _
    // Predicated region
    $region18: #{tpu_custom_call.1} parent=1 // pred_check
      _
    $region19: #{tpu_custom_call.1} parent=1 // pred_check_branch
      %27 = sbr.rel (0) target = $region21
    $region20: #{tpu_custom_call.1} parent=1 // pred_region
      _
    $region21: #{tpu_custom_call.1} parent=1 // pred_fallthru
      _
    // Predicated region
    $region22: #{tpu_custom_call.1} parent=1 // pred_check
      _
    $region23: #{tpu_custom_call.1} parent=1 // pred_check_branch
      %29 = sbr.rel (0) target = $region25
    $region24: #{tpu_custom_call.1} parent=1 // pred_region
      %s31 = ssub.s32 4096, 4096
      %32 = vsyncadd [#allocation3], %s31
      %s33 = sshll.u32 [#allocation2], 4
      %s34 = int_to_ptr.vmem [resolvable:$true] %s33
      %39 = dma.hbm_to_vmem [thread:$0]  %s5, 4096, %s34, [#allocation3], 128, 128, 8
    $region25: #{tpu_custom_call.1} parent=1 // pred_fallthru
      _
    // Predicated region
    $region26: #{tpu_custom_call.1} parent=1 // pred_check
      _
    $region27: #{tpu_custom_call.1} parent=1 // pred_check_branch
      %41 = sbr.rel (0) target = $region29
    $region28: #{tpu_custom_call.1} parent=1 // pred_region
      _
    $region29: #{tpu_custom_call.1} parent=1 // pred_fallthru
      _
    // Predicated region
    $region30: #{tpu_custom_call.1} parent=1 // pred_check
      _
    $region31: #{tpu_custom_call.1} parent=1 // pred_check_branch
      %43 = sbr.rel (0) target = $region33
    $region32: #{tpu_custom_call.1} parent=1 // pred_region
      _
    $region33: #{tpu_custom_call.1} parent=1 // pred_fallthru
      _
    // Predicated region
    $region34: #{tpu_custom_call.1} parent=1 // pred_check
      _
    $region35: #{tpu_custom_call.1} parent=1 // pred_check_branch
      %45 = sbr.rel (0) target = $region37
    $region36: #{tpu_custom_call.1} parent=1 // pred_region
      _
    $region37: #{tpu_custom_call.1} parent=1 // pred_fallthru
      _
    // Predicated region
    $region38: #{tpu_custom_call.1} parent=1 // pred_check
      _
    $region39: #{tpu_custom_call.1} parent=1 // pred_check_branch
      %47 = sbr.rel (0) target = $region41
    $region40: #{tpu_custom_call.1} parent=1 // pred_region
      _
    $region41: #{tpu_custom_call.1} parent=1 // pred_fallthru
      _
    // Predicated region
    $region42: #{tpu_custom_call.1} parent=1 // pred_check
      _
    $region43: #{tpu_custom_call.1} parent=1 // pred_check_branch
      %49 = sbr.rel (0) target = $region45
    $region44: #{tpu_custom_call.1} parent=1 // pred_region
      _
    $region45: #{tpu_custom_call.1} parent=1 // pred_fallthru
      _
    // Predicated region
    $region46: #{tpu_custom_call.1} parent=1 // pred_check
      _
    $region47: #{tpu_custom_call.1} parent=1 // pred_check_branch
      %51 = sbr.rel (0) target = $region49
    $region48: #{tpu_custom_call.1} parent=1 // pred_region
      %52 = dma.done [#allocation3], 4096
    $region49: #{tpu_custom_call.1} parent=1 // pred_fallthru
      _
    %v54 = vld [vmem:[%s0] sm:$0xff]
    %v55 = vpack.c.bf16 %v54, %v54
    %v56 = vld [vmem:[%s1] sm:$0xf]
    %v57 = vld [vmem:[%s2] sm:$0x1]
    %v59 = vlaneseq
    %v60 = vshrl.u32 %v59, 7
    %v61 = vsub.s32 0, %v60
    %v62 = vrot.slane %v57, %v61
    %vm64 = vcmask 64512
    %v66 = vsel %vm64, %v55, 0
    %vm68 = vcmask 1043456
    %v70 = vsel %vm68, %v56, 0
    %72 = vmatprep.subr.bf16.mxu0 0
    %73 = vmatpush1.bf16.msra.mxu0 0
    %74 = vmatprep.subr.bf16.mxu0 0
    %75 = vmatpush1.bf16.msra.mxu0 0
    %76 = vmatprep.subr.bf16.mxu0 0
    %77 = vmatpush1.bf16.msra.mxu0 0
    %78 = vmatprep.subr.bf16.mxu0 0
    %79 = vmatpush1.bf16.msra.mxu0 0
    %80 = vmatprep.subr.bf16.mxu0 0
    %81 = vmatpush1.bf16.msra.mxu0 0
    %82 = vmatprep.subr.bf16.mxu0 0
    %83 = vmatpush1.bf16.msra.mxu0 0
    %84 = vmatprep.subr.bf16.mxu0 0
    %85 = vmatpush1.bf16.msra.mxu0 0
    %86 = vmatprep.subr.bf16.mxu0 0
    %87 = vmatpush1.bf16.msra.mxu0 %v70
    %88 = vmatprep.subr.bf16.mxu0 0
    %89 = vmatpush2.bf16.msra.mxu0 0
    %90 = vmatprep.subr.bf16.mxu0 0
    %91 = vmatpush2.bf16.msra.mxu0 0
    %92 = vmatprep.subr.bf16.mxu0 0
    %93 = vmatpush2.bf16.msra.mxu0 0
    %94 = vmatprep.subr.bf16.mxu0 0
    %95 = vmatpush2.bf16.msra.mxu0 0
    %96 = vmatprep.subr.bf16.mxu0 0
    %97 = vmatpush2.bf16.msra.mxu0 0
    %98 = vmatprep.subr.bf16.mxu0 0
    %99 = vmatpush2.bf16.msra.mxu0 0
    %100 = vmatprep.subr.bf16.mxu0 0
    %101 = vmatpush2.bf16.msra.mxu0 0
    %102 = vmatprep.subr.bf16.mxu0 0
    %103 = vmatpush2.bf16.msra.mxu0 0
    %104 = vmatprep.mubr.bf16.mxu0 0
    %105 = vmatmul.mubr.bf16.gmra.mxu0 %v66
    %v106 = vpop.f32.mrf.mxu0
    %v107 = vadd.f32 %v62, %v106
    %v108 = vpop.f32.mrf.mxu0
    %v109 = vpop.f32.mrf.mxu0
    %v110 = vpop.f32.mrf.mxu0
    %111 = vdwg.mxu0
    %v112 = vmax.f32 %v107, 0.0
    %v113 = vpack.c.bf16 %v112, %v112
    %v114 = vld [vmem:[%s3] sm:$0xff]
    %v115 = vld [vmem:[%s3 + $0x8] sm:$0xff]
    %v116 = vld [vmem:[%s3 + $0x10] sm:$0xff]
    %v117 = vld [vmem:[%s3 + $0x18] sm:$0xff]
    %v118 = vld [vmem:[%s3 + $0x20] sm:$0xff]
    %v119 = vld [vmem:[%s3 + $0x28] sm:$0xff]
    %v120 = vld [vmem:[%s3 + $0x30] sm:$0xff]
    %v121 = vld [vmem:[%s3 + $0x38] sm:$0xff]
    %v122 = vld [vmem:[%s4] sm:$0x3]
    %v124 = vlaneseq
    %v125 = vshrl.u32 %v124, 7
    %v126 = vsub.s32 0, %v125
    %v127 = vrot.slane %v122, %v126
    %v128 = vlaneseq
    %v129 = vshrl.u32 %v128, 7
    %v130 = vsub.s32 1, %v129
    %v131 = vrot.slane %v122, %v130
    %v142 = vunpack.c.l.b16 %v114
    %v143 = vunpack.c.h.b16 %v114
    %v144 = vunpack.c.l.b16 %v115
    %v145 = vunpack.c.h.b16 %v115
    %v146 = vunpack.c.l.b16 %v116
    %v147 = vunpack.c.h.b16 %v116
    %v148 = vunpack.c.l.b16 %v117
    %v149 = vunpack.c.h.b16 %v117
    %v150 = vunpack.c.l.b16 %v118
    %v151 = vunpack.c.h.b16 %v118
    %v152 = vunpack.c.l.b16 %v119
    %v153 = vunpack.c.h.b16 %v119
    %v154 = vunpack.c.l.b16 %v120
    %v155 = vunpack.c.h.b16 %v120
    %v156 = vunpack.c.l.b16 %v121
    %v157 = vunpack.c.h.b16 %v121
    %v158 = vpack.c.b16 %v144, %v142
    %v159 = vpack.c.b16 %v145, %v143
    %v160 = vpack.c.b16 %v148, %v146
    %v161 = vpack.c.b16 %v149, %v147
    %v162 = vpack.c.b16 %v152, %v150
    %v163 = vpack.c.b16 %v153, %v151
    %v164 = vpack.c.b16 %v156, %v154
    %v165 = vpack.c.b16 %v157, %v155
    %vm174 = vcmask 523264
    %v176 = vsel %vm174, %v113, 0
    %178 = vmatprep.subr.bf16.mxu0 0
    %179 = vmatpush1.bf16.msra.mxu0 0
    %180 = vmatprep.subr.bf16.mxu0 0
    %181 = vmatpush1.bf16.msra.mxu0 0
    %182 = vmatprep.subr.bf16.mxu0 0
    %183 = vmatpush1.bf16.msra.mxu0 0
    %184 = vmatprep.subr.bf16.mxu0 0
    %185 = vmatpush1.bf16.msra.mxu0 0
    %186 = vmatprep.subr.bf16.mxu0 %v165
    %187 = vmatpush1.bf16.msra.mxu0 %v164
    %188 = vmatprep.subr.bf16.mxu0 %v163
    %189 = vmatpush1.bf16.msra.mxu0 %v162
    %190 = vmatprep.subr.bf16.mxu0 %v161
    %191 = vmatpush1.bf16.msra.mxu0 %v160
    %192 = vmatprep.subr.bf16.mxu0 %v159
    %193 = vmatpush1.bf16.msra.mxu0 %v158
    %194 = vmatprep.subr.bf16.mxu0 0
    %195 = vmatpush2.bf16.msra.mxu0 0
    %196 = vmatprep.subr.bf16.mxu0 0
    %197 = vmatpush2.bf16.msra.mxu0 0
    %198 = vmatprep.subr.bf16.mxu0 0
    %199 = vmatpush2.bf16.msra.mxu0 0
    %200 = vmatprep.subr.bf16.mxu0 0
    %201 = vmatpush2.bf16.msra.mxu0 0
    %202 = vmatprep.subr.bf16.mxu0 0
    %203 = vmatpush2.bf16.msra.mxu0 0
    %204 = vmatprep.subr.bf16.mxu0 0
    %205 = vmatpush2.bf16.msra.mxu0 0
    %206 = vmatprep.subr.bf16.mxu0 0
    %207 = vmatpush2.bf16.msra.mxu0 0
    %208 = vmatprep.subr.bf16.mxu0 0
    %209 = vmatpush2.bf16.msra.mxu0 0
    %210 = vmatprep.mubr.bf16.mxu0 0
    %211 = vmatmul.mubr.bf16.gmra.mxu0 %v176
    %v212 = vpop.f32.mrf.mxu0
    %v213 = vadd.f32 %v127, %v212
    %v214 = vpop.f32.mrf.mxu0
    %v215 = vadd.f32 %v131, %v214
    %v216 = vpop.f32.mrf.mxu0
    %v217 = vpop.f32.mrf.mxu0
    %218 = vdwg.mxu0
    %v219 = vmax.f32 %v213, 0.0
    %v220 = vmax.f32 %v215, 0.0
    %v221 = vpack.c.bf16 %v219, %v219
    %v222 = vpack.c.bf16 %v220, %v220
    %v223 = vld [vmem:[#allocation2] sm:$0xff]
    %v224 = vld [vmem:[#allocation2 + $0x8] sm:$0xff]
    %v225 = vld [vmem:[#allocation2 + $0x10] sm:$0xff]
    %v226 = vld [vmem:[#allocation2 + $0x18] sm:$0xff]
    %v227 = vld [vmem:[#allocation2 + $0x20] sm:$0xff]
    %v228 = vld [vmem:[#allocation2 + $0x28] sm:$0xff]
    %v229 = vld [vmem:[#allocation2 + $0x30] sm:$0xff]
    %v230 = vld [vmem:[#allocation2 + $0x38] sm:$0xff]
    %v231 = vld [vmem:[#allocation2 + $0x40] sm:$0xff]
    %v232 = vld [vmem:[#allocation2 + $0x48] sm:$0xff]
    %v233 = vld [vmem:[#allocation2 + $0x50] sm:$0xff]
    %v234 = vld [vmem:[#allocation2 + $0x58] sm:$0xff]
    %v235 = vld [vmem:[#allocation2 + $0x60] sm:$0xff]
    %v236 = vld [vmem:[#allocation2 + $0x68] sm:$0xff]
    %v237 = vld [vmem:[#allocation2 + $0x70] sm:$0xff]
    %v238 = vld [vmem:[#allocation2 + $0x78] sm:$0xff]
    %v239 = vld [vmem:[#allocation2 + $0x80] sm:$0xff]
    %v240 = vld [vmem:[#allocation2 + $0x88] sm:$0xff]
    %v241 = vld [vmem:[#allocation2 + $0x90] sm:$0xff]
    %v242 = vld [vmem:[#allocation2 + $0x98] sm:$0xff]
    %v243 = vld [vmem:[#allocation2 + $0xa0] sm:$0xff]
    %v244 = vld [vmem:[#allocation2 + $0xa8] sm:$0xff]
    %v245 = vld [vmem:[#allocation2 + $0xb0] sm:$0xff]
    %v246 = vld [vmem:[#allocation2 + $0xb8] sm:$0xff]
    %v247 = vld [vmem:[#allocation2 + $0xc0] sm:$0xff]
    %v248 = vld [vmem:[#allocation2 + $0xc8] sm:$0xff]
    %v249 = vld [vmem:[#allocation2 + $0xd0] sm:$0xff]
    %v250 = vld [vmem:[#allocation2 + $0xd8] sm:$0xff]
    %v251 = vld [vmem:[#allocation2 + $0xe0] sm:$0xff]
    %v252 = vld [vmem:[#allocation2 + $0xe8] sm:$0xff]
    %v253 = vld [vmem:[#allocation2 + $0xf0] sm:$0xff]
    %v254 = vld [vmem:[#allocation2 + $0xf8] sm:$0xff]
    %v255 = vld [vmem:[%s6] sm:$0x3]
    %v257 = vlaneseq
    %v258 = vshrl.u32 %v257, 7
    %v259 = vsub.s32 0, %v258
    %v260 = vrot.slane %v255, %v259
    %v261 = vlaneseq
    %v262 = vshrl.u32 %v261, 7
    %v263 = vsub.s32 1, %v262
    %v264 = vrot.slane %v255, %v263
    %v299 = vunpack.c.l.b16 %v223
    %v300 = vunpack.c.h.b16 %v223
    %v301 = vunpack.c.l.b16 %v224
    %v302 = vunpack.c.h.b16 %v224
    %v303 = vunpack.c.l.b16 %v225
    %v304 = vunpack.c.h.b16 %v225
    %v305 = vunpack.c.l.b16 %v226
    %v306 = vunpack.c.h.b16 %v226
    %v307 = vunpack.c.l.b16 %v227
    %v308 = vunpack.c.h.b16 %v227
    %v309 = vunpack.c.l.b16 %v228
    %v310 = vunpack.c.h.b16 %v228
    %v311 = vunpack.c.l.b16 %v229
    %v312 = vunpack.c.h.b16 %v229
    %v313 = vunpack.c.l.b16 %v230
    %v314 = vunpack.c.h.b16 %v230
    %v315 = vunpack.c.l.b16 %v231
    %v316 = vunpack.c.h.b16 %v231
    %v317 = vunpack.c.l.b16 %v232
    %v318 = vunpack.c.h.b16 %v232
    %v319 = vunpack.c.l.b16 %v233
    %v320 = vunpack.c.h.b16 %v233
    %v321 = vunpack.c.l.b16 %v234
    %v322 = vunpack.c.h.b16 %v234
    %v323 = vunpack.c.l.b16 %v235
    %v324 = vunpack.c.h.b16 %v235
    %v325 = vunpack.c.l.b16 %v236
    %v326 = vunpack.c.h.b16 %v236
    %v327 = vunpack.c.l.b16 %v237
    %v328 = vunpack.c.h.b16 %v237
    %v329 = vunpack.c.l.b16 %v238
    %v330 = vunpack.c.h.b16 %v238
    %v331 = vunpack.c.l.b16 %v239
    %v332 = vunpack.c.h.b16 %v239
    %v333 = vunpack.c.l.b16 %v240
    %v334 = vunpack.c.h.b16 %v240
    %v335 = vunpack.c.l.b16 %v241
    %v336 = vunpack.c.h.b16 %v241
    %v337 = vunpack.c.l.b16 %v242
    %v338 = vunpack.c.h.b16 %v242
    %v339 = vunpack.c.l.b16 %v243
    %v340 = vunpack.c.h.b16 %v243
    %v341 = vunpack.c.l.b16 %v244
    %v342 = vunpack.c.h.b16 %v244
    %v343 = vunpack.c.l.b16 %v245
    %v344 = vunpack.c.h.b16 %v245
    %v345 = vunpack.c.l.b16 %v246
    %v346 = vunpack.c.h.b16 %v246
    %v347 = vunpack.c.l.b16 %v247
    %v348 = vunpack.c.h.b16 %v247
    %v349 = vunpack.c.l.b16 %v248
    %v350 = vunpack.c.h.b16 %v248
    %v351 = vunpack.c.l.b16 %v249
    %v352 = vunpack.c.h.b16 %v249
    %v353 = vunpack.c.l.b16 %v250
    %v354 = vunpack.c.h.b16 %v250
    %v355 = vunpack.c.l.b16 %v251
    %v356 = vunpack.c.h.b16 %v251
    %v357 = vunpack.c.l.b16 %v252
    %v358 = vunpack.c.h.b16 %v252
    %v359 = vunpack.c.l.b16 %v253
    %v360 = vunpack.c.h.b16 %v253
    %v361 = vunpack.c.l.b16 %v254
    %v362 = vunpack.c.h.b16 %v254
    %v363 = vpack.c.b16 %v301, %v299
    %v364 = vpack.c.b16 %v302, %v300
    %v365 = vpack.c.b16 %v305, %v303
    %v366 = vpack.c.b16 %v306, %v304
    %v367 = vpack.c.b16 %v309, %v307
    %v368 = vpack.c.b16 %v310, %v308
    %v369 = vpack.c.b16 %v313, %v311
    %v370 = vpack.c.b16 %v314, %v312
    %v371 = vpack.c.b16 %v317, %v315
    %v372 = vpack.c.b16 %v318, %v316
    %v373 = vpack.c.b16 %v321, %v319
    %v374 = vpack.c.b16 %v322, %v320
    %v375 = vpack.c.b16 %v325, %v323
    %v376 = vpack.c.b16 %v326, %v324
    %v377 = vpack.c.b16 %v329, %v327
    %v378 = vpack.c.b16 %v330, %v328
    %v379 = vpack.c.b16 %v333, %v331
    %v380 = vpack.c.b16 %v334, %v332
    %v381 = vpack.c.b16 %v337, %v335
    %v382 = vpack.c.b16 %v338, %v336
    %v383 = vpack.c.b16 %v341, %v339
    %v384 = vpack.c.b16 %v342, %v340
    %v385 = vpack.c.b16 %v345, %v343
    %v386 = vpack.c.b16 %v346, %v344
    %v387 = vpack.c.b16 %v349, %v347
    %v388 = vpack.c.b16 %v350, %v348
    %v389 = vpack.c.b16 %v353, %v351
    %v390 = vpack.c.b16 %v354, %v352
    %v391 = vpack.c.b16 %v357, %v355
    %v392 = vpack.c.b16 %v358, %v356
    %v393 = vpack.c.b16 %v361, %v359
    %v394 = vpack.c.b16 %v362, %v360
    %427 = vmatprep.subr.bf16.mxu0 %v378
    %428 = vmatpush1.bf16.msra.mxu0 %v377
    %429 = vmatprep.subr.bf16.mxu0 %v376
    %430 = vmatpush1.bf16.msra.mxu0 %v375
    %431 = vmatprep.subr.bf16.mxu0 %v374
    %432 = vmatpush1.bf16.msra.mxu0 %v373
    %433 = vmatprep.subr.bf16.mxu0 %v372
    %434 = vmatpush1.bf16.msra.mxu0 %v371
    %435 = vmatprep.subr.bf16.mxu0 %v370
    %436 = vmatpush1.bf16.msra.mxu0 %v369
    %437 = vmatprep.subr.bf16.mxu0 %v368
    %438 = vmatpush1.bf16.msra.mxu0 %v367
    %439 = vmatprep.subr.bf16.mxu0 %v366
    %440 = vmatpush1.bf16.msra.mxu0 %v365
    %441 = vmatprep.subr.bf16.mxu0 %v364
    %442 = vmatpush1.bf16.msra.mxu0 %v363
    %443 = vmatprep.subr.bf16.mxu0 %v394
    %444 = vmatpush2.bf16.msra.mxu0 %v393
    %445 = vmatprep.subr.bf16.mxu0 %v392
    %446 = vmatpush2.bf16.msra.mxu0 %v391
    %447 = vmatprep.subr.bf16.mxu0 %v390
    %448 = vmatpush2.bf16.msra.mxu0 %v389
    %449 = vmatprep.subr.bf16.mxu0 %v388
    %450 = vmatpush2.bf16.msra.mxu0 %v387
    %451 = vmatprep.subr.bf16.mxu0 %v386
    %452 = vmatpush2.bf16.msra.mxu0 %v385
    %453 = vmatprep.subr.bf16.mxu0 %v384
    %454 = vmatpush2.bf16.msra.mxu0 %v383
    %455 = vmatprep.subr.bf16.mxu0 %v382
    %456 = vmatpush2.bf16.msra.mxu0 %v381
    %457 = vmatprep.subr.bf16.mxu0 %v380
    %458 = vmatpush2.bf16.msra.mxu0 %v379
    %459 = vmatprep.mubr.bf16.mxu0 %v222
    %460 = vmatmul.mubr.bf16.gmra.mxu0 %v221
    %v461 = vpop.f32.mrf.mxu0
    %v462 = vadd.f32 %v260, %v461
    %v463 = vpop.f32.mrf.mxu0
    %v464 = vadd.f32 %v264, %v463
    %v465 = vpop.f32.mrf.mxu0
    %v466 = vpop.f32.mrf.mxu0
    %467 = vdwg.mxu0
    %v468 = vmax.f32 %v462, 0.0
    %v469 = vmax.f32 %v464, 0.0
    %v470 = vpack.c.bf16 %v468, %v468
    %v471 = vpack.c.bf16 %v469, %v469
    %v472 = vld [vmem:[%s7] sm:$0xf]
    %v473 = vld [vmem:[%s7 + $0x4] sm:$0xf]
    %v474 = vld [vmem:[%s7 + $0x8] sm:$0xf]
    %v475 = vld [vmem:[%s7 + $0xc] sm:$0xf]
    %v476 = vld [vmem:[%s7 + $0x10] sm:$0xf]
    %v477 = vld [vmem:[%s7 + $0x14] sm:$0xf]
    %v478 = vld [vmem:[%s7 + $0x18] sm:$0xf]
    %v479 = vld [vmem:[%s7 + $0x1c] sm:$0xf]
    %v480 = vld [vmem:[%s7 + $0x20] sm:$0xf]
    %v481 = vld [vmem:[%s7 + $0x24] sm:$0xf]
    %v482 = vld [vmem:[%s7 + $0x28] sm:$0xf]
    %v483 = vld [vmem:[%s7 + $0x2c] sm:$0xf]
    %v484 = vld [vmem:[%s7 + $0x30] sm:$0xf]
    %v485 = vld [vmem:[%s7 + $0x34] sm:$0xf]
    %v486 = vld [vmem:[%s7 + $0x38] sm:$0xf]
    %v487 = vld [vmem:[%s7 + $0x3c] sm:$0xf]
    %v488 = vld [vmem:[%s7 + $0x40] sm:$0xf]
    %v489 = vld [vmem:[%s7 + $0x44] sm:$0xf]
    %v490 = vld [vmem:[%s7 + $0x48] sm:$0xf]
    %v491 = vld [vmem:[%s7 + $0x4c] sm:$0xf]
    %v492 = vld [vmem:[%s7 + $0x50] sm:$0xf]
    %v493 = vld [vmem:[%s7 + $0x54] sm:$0xf]
    %v494 = vld [vmem:[%s7 + $0x58] sm:$0xf]
    %v495 = vld [vmem:[%s7 + $0x5c] sm:$0xf]
    %v496 = vld [vmem:[%s7 + $0x60] sm:$0xf]
    %v497 = vld [vmem:[%s7 + $0x64] sm:$0xf]
    %v498 = vld [vmem:[%s7 + $0x68] sm:$0xf]
    %v499 = vld [vmem:[%s7 + $0x6c] sm:$0xf]
    %v500 = vld [vmem:[%s7 + $0x70] sm:$0xf]
    %v501 = vld [vmem:[%s7 + $0x74] sm:$0xf]
    %v502 = vld [vmem:[%s7 + $0x78] sm:$0xf]
    %v503 = vld [vmem:[%s7 + $0x7c] sm:$0xf]
    %v504 = vld [vmem:[%s8] sm:$0x1]
    %v506 = vlaneseq
    %v507 = vshrl.u32 %v506, 7
    %v508 = vsub.s32 0, %v507
    %v509 = vrot.slane %v504, %v508
    %v543 = vunpack.c.l.b16 %v472
    %v544 = vunpack.c.l.b16 %v473
    %v545 = vunpack.c.l.b16 %v474
    %v546 = vunpack.c.l.b16 %v475
    %v547 = vunpack.c.l.b16 %v476
    %v548 = vunpack.c.l.b16 %v477
    %v549 = vunpack.c.l.b16 %v478
    %v550 = vunpack.c.l.b16 %v479
    %v551 = vunpack.c.l.b16 %v480
    %v552 = vunpack.c.l.b16 %v481
    %v553 = vunpack.c.l.b16 %v482
    %v554 = vunpack.c.l.b16 %v483
    %v555 = vunpack.c.l.b16 %v484
    %v556 = vunpack.c.l.b16 %v485
    %v557 = vunpack.c.l.b16 %v486
    %v558 = vunpack.c.l.b16 %v487
    %v559 = vunpack.c.l.b16 %v488
    %v560 = vunpack.c.l.b16 %v489
    %v561 = vunpack.c.l.b16 %v490
    %v562 = vunpack.c.l.b16 %v491
    %v563 = vunpack.c.l.b16 %v492
    %v564 = vunpack.c.l.b16 %v493
    %v565 = vunpack.c.l.b16 %v494
    %v566 = vunpack.c.l.b16 %v495
    %v567 = vunpack.c.l.b16 %v496
    %v568 = vunpack.c.l.b16 %v497
    %v569 = vunpack.c.l.b16 %v498
    %v570 = vunpack.c.l.b16 %v499
    %v571 = vunpack.c.l.b16 %v500
    %v572 = vunpack.c.l.b16 %v501
    %v573 = vunpack.c.l.b16 %v502
    %v574 = vunpack.c.l.b16 %v503
    %v575 = vpack.c.b16 %v544, %v543
    %v576 = vpack.c.b16 %v546, %v545
    %v577 = vpack.c.b16 %v548, %v547
    %v578 = vpack.c.b16 %v550, %v549
    %v579 = vpack.c.b16 %v552, %v551
    %v580 = vpack.c.b16 %v554, %v553
    %v581 = vpack.c.b16 %v556, %v555
    %v582 = vpack.c.b16 %v558, %v557
    %v583 = vpack.c.b16 %v560, %v559
    %v584 = vpack.c.b16 %v562, %v561
    %v585 = vpack.c.b16 %v564, %v563
    %v586 = vpack.c.b16 %v566, %v565
    %v587 = vpack.c.b16 %v568, %v567
    %v588 = vpack.c.b16 %v570, %v569
    %v589 = vpack.c.b16 %v572, %v571
    %v590 = vpack.c.b16 %v574, %v573
    %607 = vmatprep.subr.bf16.mxu0 0
    %608 = vmatpush1.bf16.msra.mxu0 %v582
    %609 = vmatprep.subr.bf16.mxu0 0
    %610 = vmatpush1.bf16.msra.mxu0 %v581
    %611 = vmatprep.subr.bf16.mxu0 0
    %612 = vmatpush1.bf16.msra.mxu0 %v580
    %613 = vmatprep.subr.bf16.mxu0 0
    %614 = vmatpush1.bf16.msra.mxu0 %v579
    %615 = vmatprep.subr.bf16.mxu0 0
    %616 = vmatpush1.bf16.msra.mxu0 %v578
    %617 = vmatprep.subr.bf16.mxu0 0
    %618 = vmatpush1.bf16.msra.mxu0 %v577
    %619 = vmatprep.subr.bf16.mxu0 0
    %620 = vmatpush1.bf16.msra.mxu0 %v576
    %621 = vmatprep.subr.bf16.mxu0 0
    %622 = vmatpush1.bf16.msra.mxu0 %v575
    %623 = vmatprep.subr.bf16.mxu0 0
    %624 = vmatpush2.bf16.msra.mxu0 %v590
    %625 = vmatprep.subr.bf16.mxu0 0
    %626 = vmatpush2.bf16.msra.mxu0 %v589
    %627 = vmatprep.subr.bf16.mxu0 0
    %628 = vmatpush2.bf16.msra.mxu0 %v588
    %629 = vmatprep.subr.bf16.mxu0 0
    %630 = vmatpush2.bf16.msra.mxu0 %v587
    %631 = vmatprep.subr.bf16.mxu0 0
    %632 = vmatpush2.bf16.msra.mxu0 %v586
    %633 = vmatprep.subr.bf16.mxu0 0
    %634 = vmatpush2.bf16.msra.mxu0 %v585
    %635 = vmatprep.subr.bf16.mxu0 0
    %636 = vmatpush2.bf16.msra.mxu0 %v584
    %637 = vmatprep.subr.bf16.mxu0 0
    %638 = vmatpush2.bf16.msra.mxu0 %v583
    %639 = vmatprep.mubr.bf16.mxu0 %v471
    %640 = vmatmul.mubr.bf16.gmra.mxu0 %v470
    %v641 = vpop.f32.mrf.mxu0
    %v642 = vadd.f32 %v509, %v641
    %v643 = vpop.f32.mrf.mxu0
    %v644 = vpop.f32.mrf.mxu0
    %v645 = vpop.f32.mrf.mxu0
    %646 = vdwg.mxu0
    %v647 = vmax.f32 %v642, 0.0
    %v648 = vpack.c.bf16 %v647, %v647
    %v649 = vld [vmem:[%s9] sm:$0xf]
    %v650 = vld [vmem:[%s9 + $0x4] sm:$0xf]
    %v651 = vld [vmem:[%s9 + $0x8] sm:$0xf]
    %v652 = vld [vmem:[%s9 + $0xc] sm:$0xf]
    %v653 = vld [vmem:[%s9 + $0x10] sm:$0xf]
    %v654 = vld [vmem:[%s9 + $0x14] sm:$0xf]
    %v655 = vld [vmem:[%s9 + $0x18] sm:$0xf]
    %v656 = vld [vmem:[%s9 + $0x1c] sm:$0xf]
    %v657 = vld [vmem:[%s10] sm:$0x1]
    %v659 = vlaneseq
    %v660 = vshrl.u32 %v659, 7
    %v661 = vsub.s32 0, %v660
    %v662 = vrot.slane %v657, %v661
    %v672 = vunpack.c.l.b16 %v649
    %v673 = vunpack.c.l.b16 %v650
    %v674 = vunpack.c.l.b16 %v651
    %v675 = vunpack.c.l.b16 %v652
    %v676 = vunpack.c.l.b16 %v653
    %v677 = vunpack.c.l.b16 %v654
    %v678 = vunpack.c.l.b16 %v655
    %v679 = vunpack.c.l.b16 %v656
    %v680 = vpack.c.b16 %v673, %v672
    %v681 = vpack.c.b16 %v675, %v674
    %v682 = vpack.c.b16 %v677, %v676
    %v683 = vpack.c.b16 %v679, %v678
    %v689 = vsel %vm174, %v648, 0
    %691 = vmatprep.subr.bf16.mxu0 0
    %692 = vmatpush1.bf16.msra.mxu0 0
    %693 = vmatprep.subr.bf16.mxu0 0
    %694 = vmatpush1.bf16.msra.mxu0 0
    %695 = vmatprep.subr.bf16.mxu0 0
    %696 = vmatpush1.bf16.msra.mxu0 0
    %697 = vmatprep.subr.bf16.mxu0 0
    %698 = vmatpush1.bf16.msra.mxu0 0
    %699 = vmatprep.subr.bf16.mxu0 0
    %700 = vmatpush1.bf16.msra.mxu0 %v683
    %701 = vmatprep.subr.bf16.mxu0 0
    %702 = vmatpush1.bf16.msra.mxu0 %v682
    %703 = vmatprep.subr.bf16.mxu0 0
    %704 = vmatpush1.bf16.msra.mxu0 %v681
    %705 = vmatprep.subr.bf16.mxu0 0
    %706 = vmatpush1.bf16.msra.mxu0 %v680
    %707 = vmatprep.subr.bf16.mxu0 0
    %708 = vmatpush2.bf16.msra.mxu0 0
    %709 = vmatprep.subr.bf16.mxu0 0
    %710 = vmatpush2.bf16.msra.mxu0 0
    %711 = vmatprep.subr.bf16.mxu0 0
    %712 = vmatpush2.bf16.msra.mxu0 0
    %713 = vmatprep.subr.bf16.mxu0 0
    %714 = vmatpush2.bf16.msra.mxu0 0
    %715 = vmatprep.subr.bf16.mxu0 0
    %716 = vmatpush2.bf16.msra.mxu0 0
    %717 = vmatprep.subr.bf16.mxu0 0
    %718 = vmatpush2.bf16.msra.mxu0 0
    %719 = vmatprep.subr.bf16.mxu0 0
    %720 = vmatpush2.bf16.msra.mxu0 0
    %721 = vmatprep.subr.bf16.mxu0 0
    %722 = vmatpush2.bf16.msra.mxu0 0
    %723 = vmatprep.mubr.bf16.mxu0 0
    %724 = vmatmul.mubr.bf16.gmra.mxu0 %v689
    %v725 = vpop.f32.mrf.mxu0
    %v726 = vadd.f32 %v662, %v725
    %v727 = vpop.f32.mrf.mxu0
    %v728 = vpop.f32.mrf.mxu0
    %v729 = vpop.f32.mrf.mxu0
    %730 = vdwg.mxu0
    %v731 = vlaneseq
    %v732 = vand.u32 %v731, 127
    %vm733 = vcmp.lt.s32.totalorder %v732, 4
    %v734 = vmul.f32 %v726, 1.442695
    %v735 = vpow.pop %v734
    %v736 = vsel %vm733, %v726, %v735
    %737 = vst.msk [vmem:[#allocation5] sm:$0xff] %vm64, %v736
    // Predicated region
    $region50: #{tpu_custom_call.1} parent=1 // pred_check
      _
    $region51: #{tpu_custom_call.1} parent=1 // pred_check_branch
      %739 = sbr.rel (0) target = $region53
    $region52: #{tpu_custom_call.1} parent=1 // pred_region
      %s741 = ssub.s32 128, 128
      %742 = vsyncadd [#allocation4], %s741
      %s744 = sshll.u32 [#allocation5], 4
      %s745 = int_to_ptr.vmem [resolvable:$true] %s744
      %747 = dma.vmem_to_hbm [thread:$0]  %s745, 128, %s11, [#allocation4]
    $region53: #{tpu_custom_call.1} parent=1 // pred_fallthru
      _
    // Predicated region
    $region54: #{tpu_custom_call.1} parent=1 // pred_check
      _
    $region55: #{tpu_custom_call.1} parent=1 // pred_check_branch
      %749 = sbr.rel (0) target = $region57
    $region56: #{tpu_custom_call.1} parent=1 // pred_region
      %750 = dma.done [#allocation4], 128
    $region57: #{tpu_custom_call.1} parent=1 // pred_fallthru
      _
    %751 = vsyncpa [#allocation3], 1
    %752 = vsyncpa [#allocation4], 1

</llo_original>
